<compile_context>
chip_gen: v5e
topology: v5e:2x2
jax: 0.10.0
libtpu: 0.0.40
codegen_flags: <defaults>
</compile_context>

<pallas_src>
import jax
import jax.numpy as jnp
from jax.experimental import pallas as pl
from jax.experimental.pallas import tpu as pltpu


# ---------------- config (mirrors AzulNetConfig) ----------------
HIDDEN = 128
NUM_LAYERS = 3
NUM_ACTIONS = 100
MAX_FACTORIES = 9
MAX_CENTER_TILES = 20
MAX_PATTERN_LINES = 5
MAX_WALL_SIZE = 5
MAX_FLOOR_SIZE = 7
NUM_TILE_TYPES = 5


def calc_input_size():
    factory_size = MAX_FACTORIES * 6 * NUM_TILE_TYPES          # 270
    center_size = MAX_CENTER_TILES * NUM_TILE_TYPES            # 100
    wall_size = MAX_WALL_SIZE * MAX_WALL_SIZE                  # 25
    pattern_size = MAX_PATTERN_LINES * NUM_TILE_TYPES          # 25
    floor_size = MAX_FLOOR_SIZE * NUM_TILE_TYPES               # 35
    score_size = 2
    return (factory_size + center_size + wall_size * 2
            + pattern_size * 2 + floor_size * 2 + score_size)  # 542


INPUT_SIZE = calc_input_size()                  # 542
K_PAD = ((INPUT_SIZE + 127) // 128) * 128       # 640 = 5 * 128 lanes
HEAD_PAD = 128                                  # 100 policy + 1 value + 27 zero pad
TB_MAX = 2048                                   # max batch rows per grid step


def _round_up(n, m):
    return ((n + m - 1) // m) * m


def _choose_tile(B):
    """Pick the batch tile TB (multiple of 8) and number of grid steps."""
    if B <= 16:
        tb = max(8, _round_up(B, 8))
        return tb, 1
    # keep >= 2 steps so the "parallel" grid axis feeds both v7x TensorCores;
    # adaptive TB avoids padding up to a nearly-full extra tile for awkward B.
    n_steps = max(2, pl.cdiv(B, TB_MAX))
    tb = _round_up(pl.cdiv(B, n_steps), 8)
    return tb, pl.cdiv(B, tb)


# ---------------- Pallas kernel ----------------
def azul_net_kernel(x_ref,
                    w0_ref, b0_ref,
                    w1_ref, b1_ref,
                    w2_ref, b2_ref,
                    wh_ref, bh_ref,
                    head_ref,
                    xpad_ref):
    # In-kernel bf16 cast + zero-pad of the feature dim (542 -> 640).
    # Zero the last aligned 128-lane column first, then overwrite lanes [0,542)
    # with the cast data (stores to the same ref are program-ordered), so both
    # stores start lane-aligned.
    xpad_ref[:, K_PAD - 128:] = jnp.zeros((xpad_ref.shape[0], 128), jnp.bfloat16)
    xpad_ref[:, :INPUT_SIZE] = x_ref[...].astype(jnp.bfloat16)

    # Shared MLP trunk: 3 x (Linear -> ReLU). Dropout = identity (eval mode).
    # bf16 operands, f32 MXU accumulation; biases added in f32.
    h = jnp.dot(xpad_ref[...], w0_ref[...], preferred_element_type=jnp.float32)
    h = jnp.maximum(h + b0_ref[...], 0.0)

    h = jnp.dot(h.astype(jnp.bfloat16), w1_ref[...],
                preferred_element_type=jnp.float32)
    h = jnp.maximum(h + b1_ref[...], 0.0)

    h = jnp.dot(h.astype(jnp.bfloat16), w2_ref[...],
                preferred_element_type=jnp.float32)
    h = jnp.maximum(h + b2_ref[...], 0.0)

    # Fused heads: cols [0,100) = policy logits, col 100 = raw (pre-tanh) value,
    # cols [101,128) = zero pad. One full-width, lane-dense 128-wide bf16 store.
    head = jnp.dot(h.astype(jnp.bfloat16), wh_ref[...],
                   preferred_element_type=jnp.float32) + bh_ref[...]
    head_ref[...] = head.astype(jnp.bfloat16)


# ---------------- wrapper ----------------
def azul_net_forward(x, packed_params):
    """AzulNet forward. x: [B, 542] f32 -> (policy_logits [B, 100], value [B, 1])."""
    B = x.shape[0]
    w0, b0, w1, b1, w2, b2, wh, bh = packed_params

    TB, n_steps = _choose_tile(B)

    # Only tiny batches (B <= 16) are padded wrapper-side (negligible); otherwise
    # the kernel reads x unpadded and Pallas clips the last partial block.
    if B < TB:
        x = jnp.pad(x, ((0, TB - B), (0, 0)))
    B_in = x.shape[0]

    def resident(shape):
        # same block index every grid step -> Pallas keeps it resident in VMEM
        return pl.BlockSpec(shape, lambda i: (0, 0))

    rows = n_steps * TB
    flops = 2 * rows * (K_PAD * HIDDEN + 2 * HIDDEN * HIDDEN + HIDDEN * HEAD_PAD)
    bytes_accessed = (B_in * INPUT_SIZE * 4                 # f32 input read
                      + rows * HEAD_PAD * 2                 # bf16 fused head write
                      + (w0.size + w1.size + w2.size + wh.size) * 2
                      + (b0.size + b1.size + b2.size + bh.size) * 4)

    head = pl.pallas_call(
        azul_net_kernel,
        grid=(n_steps,),
        in_specs=[
            pl.BlockSpec((TB, INPUT_SIZE), lambda i: (i, 0)),       # x tile (f32, unpadded)
            resident((K_PAD, HIDDEN)), resident((1, HIDDEN)),       # layer 0
            resident((HIDDEN, HIDDEN)), resident((1, HIDDEN)),      # layer 1
            resident((HIDDEN, HIDDEN)), resident((1, HIDDEN)),      # layer 2
            resident((HIDDEN, HEAD_PAD)), resident((1, HEAD_PAD)),  # fused heads
        ],
        out_specs=pl.BlockSpec((TB, HEAD_PAD), lambda i: (i, 0)),
        out_shape=jax.ShapeDtypeStruct((B_in, HEAD_PAD), jnp.bfloat16),
        scratch_shapes=[pltpu.VMEM((TB, K_PAD), jnp.bfloat16)],     # padded bf16 x tile
        compiler_params=pltpu.CompilerParams(
            dimension_semantics=("parallel",),
            vmem_limit_bytes=32 * 1024 * 1024),
        cost_estimate=pl.CostEstimate(
            flops=flops, transcendentals=0, bytes_accessed=bytes_accessed),
    )(x, w0, b0, w1, b1, w2, b2, wh, bh)

    policy_logits = head[:B, :NUM_ACTIONS].astype(jnp.float32)
    value = jnp.tanh(head[:B, NUM_ACTIONS:NUM_ACTIONS + 1].astype(jnp.float32))
    return policy_logits, value


# ---------------- deterministic parameter init / packing ----------------
def xavier_uniform(key, fan_in, fan_out):
    limit = jnp.sqrt(6.0 / (fan_in + fan_out))
    # stored as [in, out] so the kernel can do x @ W directly
    return jax.random.uniform(key, (fan_in, fan_out), jnp.float32, -limit, limit)


def init_params(key):
    params = {"shared": []}
    in_size = INPUT_SIZE
    for _ in range(NUM_LAYERS):
        key, k = jax.random.split(key)
        params["shared"].append((xavier_uniform(k, in_size, HIDDEN),
                                 jnp.zeros((1, HIDDEN), jnp.float32)))
        in_size = HIDDEN
    key, kp, kv = jax.random.split(key, 3)
    params["policy"] = (xavier_uniform(kp, HIDDEN, NUM_ACTIONS),
                        jnp.zeros((1, NUM_ACTIONS), jnp.float32))
    params["value"] = (xavier_uniform(kv, HIDDEN, 1),
                       jnp.zeros((1, 1), jnp.float32))
    return params


def pack_params(params):
    """Pad / fuse / cast the f32 params into the kernel layout (done once)."""
    (w0, b0), (w1, b1), (w2, b2) = params["shared"]
    wp, bp = params["policy"]
    wv, bv = params["value"]
    w0p = jnp.pad(w0, ((0, K_PAD - INPUT_SIZE), (0, 0))).astype(jnp.bfloat16)
    wh = jnp.pad(jnp.concatenate([wp, wv], axis=1),
                 ((0, 0), (0, HEAD_PAD - (NUM_ACTIONS + 1)))).astype(jnp.bfloat16)
    bh = jnp.pad(jnp.concatenate([bp, bv], axis=1),
                 ((0, 0), (0, HEAD_PAD - (NUM_ACTIONS + 1))))
    return (w0p, b0,
            w1.astype(jnp.bfloat16), b1,
            w2.astype(jnp.bfloat16), b2,
            wh, bh)


# ---------------- references ----------------
def reference_forward_f32(x, params):
    """Original module semantics (pure f32)."""
    h = x
    for (w, b) in params["shared"]:
        h = jnp.maximum(h @ w + b, 0.0)
    policy = h @ params["policy"][0] + params["policy"][1]
    value = jnp.tanh(h @ params["value"][0] + params["value"][1])
    return policy, value


def reference_forward_bf16(x, params):
    """Pure-JAX emulation of the kernel's bf16-operand / f32-accumulate math."""
    h = x
    for (w, b) in params["shared"]:
        h = jnp.dot(h.astype(jnp.bfloat16), w.astype(jnp.bfloat16),
                    preferred_element_type=jnp.float32) + b
        h = jnp.maximum(h, 0.0)
    policy = jnp.dot(h.astype(jnp.bfloat16),
                     params["policy"][0].astype(jnp.bfloat16),
                     preferred_element_type=jnp.float32) + params["policy"][1]
    value = jnp.tanh(jnp.dot(h.astype(jnp.bfloat16),
                             params["value"][0].astype(jnp.bfloat16),
                             preferred_element_type=jnp.float32)
                     + params["value"][1])
    return policy, value


if __name__ == "__main__":
    key = jax.random.PRNGKey(0)
    key, k_params, k_small, k_large = jax.random.split(key, 4)

    params = init_params(k_params)
    packed = pack_params(params)

    # B=2 matches the module spec; B=1000 exercises the multi-step parallel grid
    # with a partial (clipped) last tile and no wrapper-side padding.
    for B, kx in ((2, k_small), (1000, k_large)):
        x = jax.random.normal(kx, (B, INPUT_SIZE), jnp.float32)

        policy_logits, value = azul_net_forward(x, packed)
        policy_logits = jax.block_until_ready(policy_logits)
        value = jax.block_until_ready(value)

        assert policy_logits.shape == (B, NUM_ACTIONS)
        assert value.shape == (B, 1)

        # check against a pure-JAX emulation of the kernel's bf16 math
        # (kernel additionally rounds the fused head to bf16 -> slightly looser)
        rp, rv = reference_forward_bf16(x, params)
        assert jnp.allclose(policy_logits, rp, atol=2e-2, rtol=1e-2)
        assert jnp.allclose(value, rv, atol=2e-2, rtol=1e-2)

        # loose check against the original f32 module semantics (bf16 rounding only)
        fp, fv = reference_forward_f32(x, params)
        assert jnp.allclose(policy_logits, fp, atol=0.3, rtol=0.1)
        assert jnp.allclose(value, fv, atol=0.1, rtol=0.1)

    print("KERNEL_OK")
</pallas_src>

<mosaic_0001>
module attributes {stable_mosaic.version = 11 : i64} {
  func.func @azul_net_kernel(%arg0: i32, %arg1: memref<8x542xf32, #tpu.memory_space<vmem>>, %arg2: memref<640x128xbf16, #tpu.memory_space<vmem>>, %arg3: memref<1x128xf32, #tpu.memory_space<vmem>>, %arg4: memref<128x128xbf16, #tpu.memory_space<vmem>>, %arg5: memref<1x128xf32, #tpu.memory_space<vmem>>, %arg6: memref<128x128xbf16, #tpu.memory_space<vmem>>, %arg7: memref<1x128xf32, #tpu.memory_space<vmem>>, %arg8: memref<128x128xbf16, #tpu.memory_space<vmem>>, %arg9: memref<1x128xf32, #tpu.memory_space<vmem>>, %arg10: memref<8x128xbf16, #tpu.memory_space<vmem>>, %arg11: memref<8x640xbf16, #tpu.memory_space<vmem>>) attributes {dimension_semantics = [#tpu.dimension_semantics<parallel>], iteration_bounds = array<i64: 1>, scalar_prefetch = 0 : i64, scratch_operands = 1 : i64, tpu.core_type = #tpu.core_type<tc>, window_params = [{transform_indices = @transform_0, window_bounds = array<i64: 8, 542>}, {pipeline_mode = #tpu.pipeline_mode<synchronous>, transform_indices = @transform_1, window_bounds = array<i64: 640, 128>}, {pipeline_mode = #tpu.pipeline_mode<synchronous>, transform_indices = @transform_2, window_bounds = array<i64: 1, 128>}, {pipeline_mode = #tpu.pipeline_mode<synchronous>, transform_indices = @transform_3, window_bounds = array<i64: 128, 128>}, {pipeline_mode = #tpu.pipeline_mode<synchronous>, transform_indices = @transform_4, window_bounds = array<i64: 1, 128>}, {pipeline_mode = #tpu.pipeline_mode<synchronous>, transform_indices = @transform_5, window_bounds = array<i64: 128, 128>}, {pipeline_mode = #tpu.pipeline_mode<synchronous>, transform_indices = @transform_6, window_bounds = array<i64: 1, 128>}, {pipeline_mode = #tpu.pipeline_mode<synchronous>, transform_indices = @transform_7, window_bounds = array<i64: 128, 128>}, {pipeline_mode = #tpu.pipeline_mode<synchronous>, transform_indices = @transform_8, window_bounds = array<i64: 1, 128>}, {transform_indices = @transform_9, window_bounds = array<i64: 8, 128>}]} {
    %cst = arith.constant 0.000000e+00 : bf16
    %0 = vector.broadcast %cst : bf16 to vector<8x128xbf16>
    %c0 = arith.constant 0 : index
    %c512 = arith.constant 512 : index
    %1 = vector.load %arg11[%c0, %c512] : memref<8x640xbf16, #tpu.memory_space<vmem>>, vector<8x128xbf16>
    tpu.vector_store %arg11[%c0, %c512], %0 {strides = array<i32>} : memref<8x640xbf16, #tpu.memory_space<vmem>>, vector<8x128xbf16>,
    %c0_0 = arith.constant 0 : index
    %c0_1 = arith.constant 0 : index
    %2 = vector.load %arg1[%c0_0, %c0_1] : memref<8x542xf32, #tpu.memory_space<vmem>>, vector<8x542xf32>
    %3 = arith.truncf %2 : vector<8x542xf32> to vector<8x542xbf16>
    %c0_2 = arith.constant 0 : index
    %c0_3 = arith.constant 0 : index
    %4 = vector.load %arg11[%c0_2, %c0_3] : memref<8x640xbf16, #tpu.memory_space<vmem>>, vector<8x542xbf16>
    tpu.vector_store %arg11[%c0_2, %c0_3], %3 {strides = array<i32>} : memref<8x640xbf16, #tpu.memory_space<vmem>>, vector<8x542xbf16>,
    %c0_4 = arith.constant 0 : index
    %c0_5 = arith.constant 0 : index
    %5 = vector.load %arg11[%c0_4, %c0_5] : memref<8x640xbf16, #tpu.memory_space<vmem>>, vector<8x640xbf16>
    %c0_6 = arith.constant 0 : index
    %c0_7 = arith.constant 0 : index
    %6 = vector.load %arg2[%c0_6, %c0_7] : memref<640x128xbf16, #tpu.memory_space<vmem>>, vector<640x128xbf16>
    %cst_8 = arith.constant dense<0.000000e+00> : vector<8x128xf32>
    %7 = tpu.matmul %5, %6, %cst_8 {dimension_numbers = #tpu.dot_dimension_numbers<[1], [0], [0], [1], [0, 0, 1, 1], [], []>} : vector<8x640xbf16>, vector<640x128xbf16>, vector<8x128xf32> -> vector<8x128xf32>
    %c0_9 = arith.constant 0 : index
    %c0_10 = arith.constant 0 : index
    %8 = vector.load %arg3[%c0_9, %c0_10] : memref<1x128xf32, #tpu.memory_space<vmem>>, vector<1x128xf32>
    %9 = vector.broadcast %8 : vector<1x128xf32> to vector<8x128xf32>
    %10 = arith.addf %7, %9 : vector<8x128xf32>
    %cst_11 = arith.constant 0.000000e+00 : f32
    %11 = vector.broadcast %cst_11 : f32 to vector<8x128xf32>
    %12 = arith.maximumf %10, %11 : vector<8x128xf32>
    %13 = arith.truncf %12 : vector<8x128xf32> to vector<8x128xbf16>
    %c0_12 = arith.constant 0 : index
    %c0_13 = arith.constant 0 : index
    %14 = vector.load %arg4[%c0_12, %c0_13] : memref<128x128xbf16, #tpu.memory_space<vmem>>, vector<128x128xbf16>
    %cst_14 = arith.constant dense<0.000000e+00> : vector<8x128xf32>
    %15 = tpu.matmul %13, %14, %cst_14 {dimension_numbers = #tpu.dot_dimension_numbers<[1], [0], [0], [1], [0, 0, 1, 1], [], []>} : vector<8x128xbf16>, vector<128x128xbf16>, vector<8x128xf32> -> vector<8x128xf32>
    %c0_15 = arith.constant 0 : index
    %c0_16 = arith.constant 0 : index
    %16 = vector.load %arg5[%c0_15, %c0_16] : memref<1x128xf32, #tpu.memory_space<vmem>>, vector<1x128xf32>
    %17 = vector.broadcast %16 : vector<1x128xf32> to vector<8x128xf32>
    %18 = arith.addf %15, %17 : vector<8x128xf32>
    %cst_17 = arith.constant 0.000000e+00 : f32
    %19 = vector.broadcast %cst_17 : f32 to vector<8x128xf32>
    %20 = arith.maximumf %18, %19 : vector<8x128xf32>
    %21 = arith.truncf %20 : vector<8x128xf32> to vector<8x128xbf16>
    %c0_18 = arith.constant 0 : index
    %c0_19 = arith.constant 0 : index
    %22 = vector.load %arg6[%c0_18, %c0_19] : memref<128x128xbf16, #tpu.memory_space<vmem>>, vector<128x128xbf16>
    %cst_20 = arith.constant dense<0.000000e+00> : vector<8x128xf32>
    %23 = tpu.matmul %21, %22, %cst_20 {dimension_numbers = #tpu.dot_dimension_numbers<[1], [0], [0], [1], [0, 0, 1, 1], [], []>} : vector<8x128xbf16>, vector<128x128xbf16>, vector<8x128xf32> -> vector<8x128xf32>
    %c0_21 = arith.constant 0 : index
    %c0_22 = arith.constant 0 : index
    %24 = vector.load %arg7[%c0_21, %c0_22] : memref<1x128xf32, #tpu.memory_space<vmem>>, vector<1x128xf32>
    %25 = vector.broadcast %24 : vector<1x128xf32> to vector<8x128xf32>
    %26 = arith.addf %23, %25 : vector<8x128xf32>
    %cst_23 = arith.constant 0.000000e+00 : f32
    %27 = vector.broadcast %cst_23 : f32 to vector<8x128xf32>
    %28 = arith.maximumf %26, %27 : vector<8x128xf32>
    %29 = arith.truncf %28 : vector<8x128xf32> to vector<8x128xbf16>
    %c0_24 = arith.constant 0 : index
    %c0_25 = arith.constant 0 : index
    %30 = vector.load %arg8[%c0_24, %c0_25] : memref<128x128xbf16, #tpu.memory_space<vmem>>, vector<128x128xbf16>
    %cst_26 = arith.constant dense<0.000000e+00> : vector<8x128xf32>
    %31 = tpu.matmul %29, %30, %cst_26 {dimension_numbers = #tpu.dot_dimension_numbers<[1], [0], [0], [1], [0, 0, 1, 1], [], []>} : vector<8x128xbf16>, vector<128x128xbf16>, vector<8x128xf32> -> vector<8x128xf32>
    %c0_27 = arith.constant 0 : index
    %c0_28 = arith.constant 0 : index
    %32 = vector.load %arg9[%c0_27, %c0_28] : memref<1x128xf32, #tpu.memory_space<vmem>>, vector<1x128xf32>
    %33 = vector.broadcast %32 : vector<1x128xf32> to vector<8x128xf32>
    %34 = arith.addf %31, %33 : vector<8x128xf32>
    %35 = arith.truncf %34 : vector<8x128xf32> to vector<8x128xbf16>
    %c0_29 = arith.constant 0 : index
    %c0_30 = arith.constant 0 : index
    %36 = vector.load %arg10[%c0_29, %c0_30] : memref<8x128xbf16, #tpu.memory_space<vmem>>, vector<8x128xbf16>
    tpu.vector_store %arg10[%c0_29, %c0_30], %35 {strides = array<i32>} : memref<8x128xbf16, #tpu.memory_space<vmem>>, vector<8x128xbf16>,
    return
  }
  func.func @transform_0(%arg0: i32) -> (i32, i32) {
    %c0_i32 = arith.constant 0 : i32
    %c0_i32_0 = arith.constant 0 : i32
    return %arg0, %c0_i32 : i32, i32
  }
  func.func @transform_1(%arg0: i32) -> (i32, i32) {
    %c0_i32 = arith.constant 0 : i32
    %c0_i32_0 = arith.constant 0 : i32
    %c0_i32_1 = arith.constant 0 : i32
    return %c0_i32, %c0_i32_0 : i32, i32
  }
  func.func @transform_2(%arg0: i32) -> (i32, i32) {
    %c0_i32 = arith.constant 0 : i32
    %c0_i32_0 = arith.constant 0 : i32
    %c0_i32_1 = arith.constant 0 : i32
    return %c0_i32, %c0_i32_0 : i32, i32
  }
  func.func @transform_3(%arg0: i32) -> (i32, i32) {
    %c0_i32 = arith.constant 0 : i32
    %c0_i32_0 = arith.constant 0 : i32
    %c0_i32_1 = arith.constant 0 : i32
    return %c0_i32, %c0_i32_0 : i32, i32
  }
  func.func @transform_4(%arg0: i32) -> (i32, i32) {
    %c0_i32 = arith.constant 0 : i32
    %c0_i32_0 = arith.constant 0 : i32
    %c0_i32_1 = arith.constant 0 : i32
    return %c0_i32, %c0_i32_0 : i32, i32
  }
  func.func @transform_5(%arg0: i32) -> (i32, i32) {
    %c0_i32 = arith.constant 0 : i32
    %c0_i32_0 = arith.constant 0 : i32
    %c0_i32_1 = arith.constant 0 : i32
    return %c0_i32, %c0_i32_0 : i32, i32
  }
  func.func @transform_6(%arg0: i32) -> (i32, i32) {
    %c0_i32 = arith.constant 0 : i32
    %c0_i32_0 = arith.constant 0 : i32
    %c0_i32_1 = arith.constant 0 : i32
    return %c0_i32, %c0_i32_0 : i32, i32
  }
  func.func @transform_7(%arg0: i32) -> (i32, i32) {
    %c0_i32 = arith.constant 0 : i32
    %c0_i32_0 = arith.constant 0 : i32
    %c0_i32_1 = arith.constant 0 : i32
    return %c0_i32, %c0_i32_0 : i32, i32
  }
  func.func @transform_8(%arg0: i32) -> (i32, i32) {
    %c0_i32 = arith.constant 0 : i32
    %c0_i32_0 = arith.constant 0 : i32
    %c0_i32_1 = arith.constant 0 : i32
    return %c0_i32, %c0_i32_0 : i32, i32
  }
  func.func @transform_9(%arg0: i32) -> (i32, i32) {
    %c0_i32 = arith.constant 0 : i32
    %c0_i32_0 = arith.constant 0 : i32
    return %arg0, %c0_i32 : i32, i32
  }
}

</mosaic_0001>

<llo_original>
// kernel: tpu_custom_call.1
$region0: #{tpu_custom_call.1}
  #allocation0 [shape = 'u32[]', space=smem, size = 0x4, offset = 0x4, fixed_abs, tag = 'smem constant byte address 0x4 - core index']
  #allocation1 [shape = 'u32[72,128]{1,0:T(1,128)}', space=vmem, size = 0x9000, scoped, tag = 'internal scratch']
  #allocation2 [shape = 'bf16[8,640]{1,0:T(8,128)(2,1)}', space=vmem, size = 0x2800, scoped, tag = 'scratch operand']
  %s0 = inlined_call_operand.hbm [shape: f32[8,542], index: 0, kind: input, shape index: {}]
  %s1 = inlined_call_operand.hbm [shape: bf16[640,128], index: 1, kind: input, shape index: {}]
  %s2 = inlined_call_operand.vmem [shape: f32[1,128], index: 2, kind: input, shape index: {}]
  %s3 = inlined_call_operand.hbm [shape: bf16[128,128], index: 3, kind: input, shape index: {}]
  %s4 = inlined_call_operand.vmem [shape: f32[1,128], index: 4, kind: input, shape index: {}]
  %s5 = inlined_call_operand.hbm [shape: bf16[128,128], index: 5, kind: input, shape index: {}]
  %s6 = inlined_call_operand.vmem [shape: f32[1,128], index: 6, kind: input, shape index: {}]
  %s7 = inlined_call_operand.hbm [shape: bf16[128,128], index: 7, kind: input, shape index: {}]
  %s8 = inlined_call_operand.vmem [shape: f32[1,128], index: 8, kind: input, shape index: {}]
  %s9 = inlined_call_operand.hbm [shape: bf16[8,128], index: 9, kind: output, shape index: {}]
  %s10 = sld [smem:[#allocation0]]
  $region66: #{tpu_custom_call.1} parent=0
    _
  %s12 = ssub.s32 1, %s10
  %s13 = scalar_select 0, %s12, %s10
  $region1: #{tpu_custom_call.1} parent=0
    #allocation3 [shape = 'u8[20480]{0}', space=vmem, size = 0x5000, scoped, tag = 'input window, operand 0, single buffered']
    #allocation4 [shape = 's32[1]{0}', space=sflag, size = 0x4, scoped, tag = 'scoped memory for tpu_custom_call.1']
    #allocation5 [shape = 's32[1]{0}', space=sflag, size = 0x4, scoped, tag = 'scoped memory for tpu_custom_call.1']
    #allocation6 [shape = 'u8[163840]{0}', space=vmem, size = 0x28000, scoped, tag = 'input window, operand 1, single buffered']
    #allocation7 [shape = 's32[1]{0}', space=sflag, size = 0x4, scoped, tag = 'scoped memory for tpu_custom_call.1']
    #allocation8 [shape = 'u8[32768]{0}', space=vmem, size = 0x8000, scoped, tag = 'input window, operand 3, single buffered']
    #allocation9 [shape = 'u8[32768]{0}', space=vmem, size = 0x8000, scoped, tag = 'input window, operand 5, single buffered']
    #allocation10 [shape = 's32[1]{0}', space=sflag, size = 0x4, scoped, tag = 'scoped memory for tpu_custom_call.1']
    #allocation11 [shape = 'u8[32768]{0}', space=vmem, size = 0x8000, scoped, tag = 'input window, operand 7, single buffered']
    #allocation12 [shape = 'u8[2048]{0}', space=vmem, size = 0x800, scoped, tag = 'output window, operand 0, single buffered']
    %14 = vsyncpa [#allocation4], 0
    %15 = vsyncpa [#allocation7], 0
    %16 = vsyncpa [#allocation10], 0
    %17 = vsyncpa [#allocation5], 0
    // Predicated region
    $region2: #{tpu_custom_call.1} parent=1 // pred_check
      _
    $region3: #{tpu_custom_call.1} parent=1 // pred_check_branch
      %19 = sbr.rel (0) target = $region5
    $region4: #{tpu_custom_call.1} parent=1 // pred_region
      %21 = vsyncadd [#allocation4], 0
      %s23 = sshll.u32 %s0, 4
      %s24 = int_to_ptr.hbm [resolvable:$true] %s23
      %s25 = sshll.u32 [#allocation3], 4
      %s26 = int_to_ptr.vmem [resolvable:$true] %s25
      %28 = dma.hbm_to_vmem [thread:$0]  %s24, 640, %s26, [#allocation4]
    $region5: #{tpu_custom_call.1} parent=1 // pred_fallthru
      _
    // Predicated region
    $region6: #{tpu_custom_call.1} parent=1 // pred_check
      _
    $region7: #{tpu_custom_call.1} parent=1 // pred_check_branch
      %30 = sbr.rel (0) target = $region9
    $region8: #{tpu_custom_call.1} parent=1 // pred_region
      %32 = vsyncadd [#allocation7], 0
      %s33 = sshll.u32 %s1, 4
      %s34 = int_to_ptr.hbm [resolvable:$true] %s33
      %s35 = sshll.u32 [#allocation6], 4
      %s36 = int_to_ptr.vmem [resolvable:$true] %s35
      %41 = dma.hbm_to_vmem [thread:$0]  %s34, 5120, %s36, [#allocation7], 64, 64, 4
    $region9: #{tpu_custom_call.1} parent=1 // pred_fallthru
      _
    // Predicated region
    $region10: #{tpu_custom_call.1} parent=1 // pred_check
      _
    $region11: #{tpu_custom_call.1} parent=1 // pred_check_branch
      %43 = sbr.rel (0) target = $region13
    $region12: #{tpu_custom_call.1} parent=1 // pred_region
      _
    $region13: #{tpu_custom_call.1} parent=1 // pred_fallthru
      _
    // Predicated region
    $region14: #{tpu_custom_call.1} parent=1 // pred_check
      _
    $region15: #{tpu_custom_call.1} parent=1 // pred_check_branch
      %45 = sbr.rel (0) target = $region17
    $region16: #{tpu_custom_call.1} parent=1 // pred_region
      %47 = vsyncadd [#allocation7], 0
      %s48 = sshll.u32 %s3, 4
      %s49 = int_to_ptr.hbm [resolvable:$true] %s48
      %s50 = sshll.u32 [#allocation8], 4
      %s51 = int_to_ptr.vmem [resolvable:$true] %s50
      %56 = dma.hbm_to_vmem [thread:$0]  %s49, 1024, %s51, [#allocation7], 64, 64, 4
    $region17: #{tpu_custom_call.1} parent=1 // pred_fallthru
      _
    // Predicated region
    $region18: #{tpu_custom_call.1} parent=1 // pred_check
      _
    $region19: #{tpu_custom_call.1} parent=1 // pred_check_branch
      %58 = sbr.rel (0) target = $region21
    $region20: #{tpu_custom_call.1} parent=1 // pred_region
      _
    $region21: #{tpu_custom_call.1} parent=1 // pred_fallthru
      _
    // Predicated region
    $region22: #{tpu_custom_call.1} parent=1 // pred_check
      _
    $region23: #{tpu_custom_call.1} parent=1 // pred_check_branch
      %60 = sbr.rel (0) target = $region25
    $region24: #{tpu_custom_call.1} parent=1 // pred_region
      %62 = vsyncadd [#allocation10], 0
      %s63 = sshll.u32 %s5, 4
      %s64 = int_to_ptr.hbm [resolvable:$true] %s63
      %s65 = sshll.u32 [#allocation9], 4
      %s66 = int_to_ptr.vmem [resolvable:$true] %s65
      %71 = dma.hbm_to_vmem [thread:$0]  %s64, 1024, %s66, [#allocation10], 64, 64, 4
    $region25: #{tpu_custom_call.1} parent=1 // pred_fallthru
      _
    // Predicated region
    $region26: #{tpu_custom_call.1} parent=1 // pred_check
      _
    $region27: #{tpu_custom_call.1} parent=1 // pred_check_branch
      %73 = sbr.rel (0) target = $region29
    $region28: #{tpu_custom_call.1} parent=1 // pred_region
      _
    $region29: #{tpu_custom_call.1} parent=1 // pred_fallthru
      _
    // Predicated region
    $region30: #{tpu_custom_call.1} parent=1 // pred_check
      _
    $region31: #{tpu_custom_call.1} parent=1 // pred_check_branch
      %75 = sbr.rel (0) target = $region33
    $region32: #{tpu_custom_call.1} parent=1 // pred_region
      %77 = vsyncadd [#allocation10], 0
      %s78 = sshll.u32 %s7, 4
      %s79 = int_to_ptr.hbm [resolvable:$true] %s78
      %s80 = sshll.u32 [#allocation11], 4
      %s81 = int_to_ptr.vmem [resolvable:$true] %s80
      %86 = dma.hbm_to_vmem [thread:$0]  %s79, 1024, %s81, [#allocation10], 64, 64, 4
    $region33: #{tpu_custom_call.1} parent=1 // pred_fallthru
      _
    // Predicated region
    $region34: #{tpu_custom_call.1} parent=1 // pred_check
      _
    $region35: #{tpu_custom_call.1} parent=1 // pred_check_branch
      %88 = sbr.rel (0) target = $region37
    $region36: #{tpu_custom_call.1} parent=1 // pred_region
      _
    $region37: #{tpu_custom_call.1} parent=1 // pred_fallthru
      _
    // Predicated region
    $region38: #{tpu_custom_call.1} parent=1 // pred_check
      _
    $region39: #{tpu_custom_call.1} parent=1 // pred_check_branch
      %90 = sbr.rel (0) target = $region41
    $region40: #{tpu_custom_call.1} parent=1 // pred_region
      %92 = dma.done [#allocation4], 640
    $region41: #{tpu_custom_call.1} parent=1 // pred_fallthru
      _
    // Predicated region
    $region42: #{tpu_custom_call.1} parent=1 // pred_check
      _
    $region43: #{tpu_custom_call.1} parent=1 // pred_check_branch
      %94 = sbr.rel (0) target = $region45
    $region44: #{tpu_custom_call.1} parent=1 // pred_region
      %96 = dma.done [#allocation7], 5120
    $region45: #{tpu_custom_call.1} parent=1 // pred_fallthru
      _
    // Predicated region
    $region46: #{tpu_custom_call.1} parent=1 // pred_check
      _
    $region47: #{tpu_custom_call.1} parent=1 // pred_check_branch
      %98 = sbr.rel (0) target = $region49
    $region48: #{tpu_custom_call.1} parent=1 // pred_region
      %100 = dma.done [#allocation7], 1024
    $region49: #{tpu_custom_call.1} parent=1 // pred_fallthru
      _
    // Predicated region
    $region50: #{tpu_custom_call.1} parent=1 // pred_check
      _
    $region51: #{tpu_custom_call.1} parent=1 // pred_check_branch
      %102 = sbr.rel (0) target = $region53
    $region52: #{tpu_custom_call.1} parent=1 // pred_region
      %104 = dma.done [#allocation10], 1024
    $region53: #{tpu_custom_call.1} parent=1 // pred_fallthru
      _
    // Predicated region
    $region54: #{tpu_custom_call.1} parent=1 // pred_check
      _
    $region55: #{tpu_custom_call.1} parent=1 // pred_check_branch
      %106 = sbr.rel (0) target = $region57
    $region56: #{tpu_custom_call.1} parent=1 // pred_region
      %108 = dma.done [#allocation10], 1024
    $region57: #{tpu_custom_call.1} parent=1 // pred_fallthru
      _
    %110 = vst [vmem:[#allocation2 + $0x10] sm:$0xf] 0
    %v111 = vld [vmem:[#allocation3] sm:$0xff]
    %v112 = vld [vmem:[#allocation3 + $0x8] sm:$0xff]
    %v113 = vld [vmem:[#allocation3 + $0x10] sm:$0xff]
    %v114 = vld [vmem:[#allocation3 + $0x18] sm:$0xff]
    %v115 = vld [vmem:[#allocation3 + $0x20] sm:$0xff]
    %v116 = vpack.c.bf16 %v112, %v111
    %v117 = vpack.c.bf16 %v114, %v113
    %v118 = vpack.c.bf16 %v115, %v115
    %119 = vst [vmem:[#allocation2] sm:$0xff] %v116
    %120 = vst [vmem:[#allocation2 + $0x8] sm:$0xff] %v117
    %vm121 = vcmask 240640
    %122 = vst.msk [vmem:[#allocation2 + $0x10] sm:$0xf] %vm121, %v118
    %v123 = vld [vmem:[#allocation2] sm:$0xff]
    %v124 = vld [vmem:[#allocation2 + $0x8] sm:$0xff]
    %v125 = vld [vmem:[#allocation2 + $0x10] sm:$0xf]
    %v126 = vld [vmem:[#allocation6] sm:$0xf]
    %v127 = vld [vmem:[#allocation6 + $0x4] sm:$0xf]
    %v128 = vld [vmem:[#allocation6 + $0x8] sm:$0xf]
    %v129 = vld [vmem:[#allocation6 + $0xc] sm:$0xf]
    %v130 = vld [vmem:[#allocation6 + $0x10] sm:$0xf]
    %v131 = vld [vmem:[#allocation6 + $0x14] sm:$0xf]
    %v132 = vld [vmem:[#allocation6 + $0x18] sm:$0xf]
    %v133 = vld [vmem:[#allocation6 + $0x1c] sm:$0xf]
    %v134 = vld [vmem:[#allocation6 + $0x20] sm:$0xf]
    %v135 = vld [vmem:[#allocation6 + $0x24] sm:$0xf]
    %v136 = vld [vmem:[#allocation6 + $0x28] sm:$0xf]
    %v137 = vld [vmem:[#allocation6 + $0x2c] sm:$0xf]
    %v138 = vld [vmem:[#allocation6 + $0x30] sm:$0xf]
    %v139 = vld [vmem:[#allocation6 + $0x34] sm:$0xf]
    %v140 = vld [vmem:[#allocation6 + $0x38] sm:$0xf]
    %v141 = vld [vmem:[#allocation6 + $0x3c] sm:$0xf]
    %v142 = vld [vmem:[#allocation6 + $0x40] sm:$0xf]
    %v143 = vld [vmem:[#allocation6 + $0x44] sm:$0xf]
    %v144 = vld [vmem:[#allocation6 + $0x48] sm:$0xf]
    %v145 = vld [vmem:[#allocation6 + $0x4c] sm:$0xf]
    %v146 = vld [vmem:[#allocation6 + $0x50] sm:$0xf]
    %v147 = vld [vmem:[#allocation6 + $0x54] sm:$0xf]
    %v148 = vld [vmem:[#allocation6 + $0x58] sm:$0xf]
    %v149 = vld [vmem:[#allocation6 + $0x5c] sm:$0xf]
    %v150 = vld [vmem:[#allocation6 + $0x60] sm:$0xf]
    %v151 = vld [vmem:[#allocation6 + $0x64] sm:$0xf]
    %v152 = vld [vmem:[#allocation6 + $0x68] sm:$0xf]
    %v153 = vld [vmem:[#allocation6 + $0x6c] sm:$0xf]
    %v154 = vld [vmem:[#allocation6 + $0x70] sm:$0xf]
    %v155 = vld [vmem:[#allocation6 + $0x74] sm:$0xf]
    %v156 = vld [vmem:[#allocation6 + $0x78] sm:$0xf]
    %v157 = vld [vmem:[#allocation6 + $0x7c] sm:$0xf]
    %v158 = vld [vmem:[#allocation6 + $0x80] sm:$0xf]
    %v159 = vld [vmem:[#allocation6 + $0x84] sm:$0xf]
    %v160 = vld [vmem:[#allocation6 + $0x88] sm:$0xf]
    %v161 = vld [vmem:[#allocation6 + $0x8c] sm:$0xf]
    %v162 = vld [vmem:[#allocation6 + $0x90] sm:$0xf]
    %v163 = vld [vmem:[#allocation6 + $0x94] sm:$0xf]
    %v164 = vld [vmem:[#allocation6 + $0x98] sm:$0xf]
    %v165 = vld [vmem:[#allocation6 + $0x9c] sm:$0xf]
    %v166 = vld [vmem:[#allocation6 + $0xa0] sm:$0xf]
    %v167 = vld [vmem:[#allocation6 + $0xa4] sm:$0xf]
    %v168 = vld [vmem:[#allocation6 + $0xa8] sm:$0xf]
    %v169 = vld [vmem:[#allocation6 + $0xac] sm:$0xf]
    %v170 = vld [vmem:[#allocation6 + $0xb0] sm:$0xf]
    %v171 = vld [vmem:[#allocation6 + $0xb4] sm:$0xf]
    %v172 = vld [vmem:[#allocation6 + $0xb8] sm:$0xf]
    %v173 = vld [vmem:[#allocation6 + $0xbc] sm:$0xf]
    %v174 = vld [vmem:[#allocation6 + $0xc0] sm:$0xf]
    %v175 = vld [vmem:[#allocation6 + $0xc4] sm:$0xf]
    %v176 = vld [vmem:[#allocation6 + $0xc8] sm:$0xf]
    %v177 = vld [vmem:[#allocation6 + $0xcc] sm:$0xf]
    %v178 = vld [vmem:[#allocation6 + $0xd0] sm:$0xf]
    %v179 = vld [vmem:[#allocation6 + $0xd4] sm:$0xf]
    %v180 = vld [vmem:[#allocation6 + $0xd8] sm:$0xf]
    %v181 = vld [vmem:[#allocation6 + $0xdc] sm:$0xf]
    %v182 = vld [vmem:[#allocation6 + $0xe0] sm:$0xf]
    %v183 = vld [vmem:[#allocation6 + $0xe4] sm:$0xf]
    %v184 = vld [vmem:[#allocation6 + $0xe8] sm:$0xf]
    %v185 = vld [vmem:[#allocation6 + $0xec] sm:$0xf]
    %v186 = vld [vmem:[#allocation6 + $0xf0] sm:$0xf]
    %v187 = vld [vmem:[#allocation6 + $0xf4] sm:$0xf]
    %v188 = vld [vmem:[#allocation6 + $0xf8] sm:$0xf]
    %v189 = vld [vmem:[#allocation6 + $0xfc] sm:$0xf]
    %v190 = vld [vmem:[#allocation6 + $0x100] sm:$0xf]
    %v191 = vld [vmem:[#allocation6 + $0x104] sm:$0xf]
    %v192 = vld [vmem:[#allocation6 + $0x108] sm:$0xf]
    %v193 = vld [vmem:[#allocation6 + $0x10c] sm:$0xf]
    %v194 = vld [vmem:[#allocation6 + $0x110] sm:$0xf]
    %v195 = vld [vmem:[#allocation6 + $0x114] sm:$0xf]
    %v196 = vld [vmem:[#allocation6 + $0x118] sm:$0xf]
    %v197 = vld [vmem:[#allocation6 + $0x11c] sm:$0xf]
    %v198 = vld [vmem:[#allocation6 + $0x120] sm:$0xf]
    %v199 = vld [vmem:[#allocation6 + $0x124] sm:$0xf]
    %v200 = vld [vmem:[#allocation6 + $0x128] sm:$0xf]
    %v201 = vld [vmem:[#allocation6 + $0x12c] sm:$0xf]
    %v202 = vld [vmem:[#allocation6 + $0x130] sm:$0xf]
    %v203 = vld [vmem:[#allocation6 + $0x134] sm:$0xf]
    %v204 = vld [vmem:[#allocation6 + $0x138] sm:$0xf]
    %v205 = vld [vmem:[#allocation6 + $0x13c] sm:$0xf]
    %v206 = vld [vmem:[%s2] sm:$0x1]
    %v208 = vperm.slane %v206, 0
    %v213 = vunpack.c.l.b16 %v123
    %v214 = vunpack.c.h.b16 %v123
    %v215 = vunpack.c.l.b16 %v124
    %v216 = vunpack.c.h.b16 %v124
    %v217 = vunpack.c.l.b16 %v125
    %v218 = vpack.c.b16 %v213, %v213
    %v219 = vpack.c.b16 %v214, %v214
    %v220 = vpack.c.b16 %v215, %v215
    %v221 = vpack.c.b16 %v216, %v216
    %v222 = vpack.c.b16 %v217, %v217
    %v308 = vunpack.c.l.b16 %v126
    %v309 = vunpack.c.l.b16 %v127
    %v310 = vunpack.c.l.b16 %v128
    %v311 = vunpack.c.l.b16 %v129
    %v312 = vunpack.c.l.b16 %v130
    %v313 = vunpack.c.l.b16 %v131
    %v314 = vunpack.c.l.b16 %v132
    %v315 = vunpack.c.l.b16 %v133
    %v316 = vunpack.c.l.b16 %v134
    %v317 = vunpack.c.l.b16 %v135
    %v318 = vunpack.c.l.b16 %v136
    %v319 = vunpack.c.l.b16 %v137
    %v320 = vunpack.c.l.b16 %v138
    %v321 = vunpack.c.l.b16 %v139
    %v322 = vunpack.c.l.b16 %v140
    %v323 = vunpack.c.l.b16 %v141
    %v324 = vunpack.c.l.b16 %v142
    %v325 = vunpack.c.l.b16 %v143
    %v326 = vunpack.c.l.b16 %v144
    %v327 = vunpack.c.l.b16 %v145
    %v328 = vunpack.c.l.b16 %v146
    %v329 = vunpack.c.l.b16 %v147
    %v330 = vunpack.c.l.b16 %v148
    %v331 = vunpack.c.l.b16 %v149
    %v332 = vunpack.c.l.b16 %v150
    %v333 = vunpack.c.l.b16 %v151
    %v334 = vunpack.c.l.b16 %v152
    %v335 = vunpack.c.l.b16 %v153
    %v336 = vunpack.c.l.b16 %v154
    %v337 = vunpack.c.l.b16 %v155
    %v338 = vunpack.c.l.b16 %v156
    %v339 = vunpack.c.l.b16 %v157
    %v340 = vunpack.c.l.b16 %v158
    %v341 = vunpack.c.l.b16 %v159
    %v342 = vunpack.c.l.b16 %v160
    %v343 = vunpack.c.l.b16 %v161
    %v344 = vunpack.c.l.b16 %v162
    %v345 = vunpack.c.l.b16 %v163
    %v346 = vunpack.c.l.b16 %v164
    %v347 = vunpack.c.l.b16 %v165
    %v348 = vunpack.c.l.b16 %v166
    %v349 = vunpack.c.l.b16 %v167
    %v350 = vunpack.c.l.b16 %v168
    %v351 = vunpack.c.l.b16 %v169
    %v352 = vunpack.c.l.b16 %v170
    %v353 = vunpack.c.l.b16 %v171
    %v354 = vunpack.c.l.b16 %v172
    %v355 = vunpack.c.l.b16 %v173
    %v356 = vunpack.c.l.b16 %v174
    %v357 = vunpack.c.l.b16 %v175
    %v358 = vunpack.c.l.b16 %v176
    %v359 = vunpack.c.l.b16 %v177
    %v360 = vunpack.c.l.b16 %v178
    %v361 = vunpack.c.l.b16 %v179
    %v362 = vunpack.c.l.b16 %v180
    %v363 = vunpack.c.l.b16 %v181
    %v364 = vunpack.c.l.b16 %v182
    %v365 = vunpack.c.l.b16 %v183
    %v366 = vunpack.c.l.b16 %v184
    %v367 = vunpack.c.l.b16 %v185
    %v368 = vunpack.c.l.b16 %v186
    %v369 = vunpack.c.l.b16 %v187
    %v370 = vunpack.c.l.b16 %v188
    %v371 = vunpack.c.l.b16 %v189
    %v372 = vunpack.c.l.b16 %v190
    %v373 = vunpack.c.l.b16 %v191
    %v374 = vunpack.c.l.b16 %v192
    %v375 = vunpack.c.l.b16 %v193
    %v376 = vunpack.c.l.b16 %v194
    %v377 = vunpack.c.l.b16 %v195
    %v378 = vunpack.c.l.b16 %v196
    %v379 = vunpack.c.l.b16 %v197
    %v380 = vunpack.c.l.b16 %v198
    %v381 = vunpack.c.l.b16 %v199
    %v382 = vunpack.c.l.b16 %v200
    %v383 = vunpack.c.l.b16 %v201
    %v384 = vunpack.c.l.b16 %v202
    %v385 = vunpack.c.l.b16 %v203
    %v386 = vunpack.c.l.b16 %v204
    %v387 = vunpack.c.l.b16 %v205
    %v388 = vpack.c.b16 %v309, %v308
    %v389 = vpack.c.b16 %v311, %v310
    %v390 = vpack.c.b16 %v313, %v312
    %v391 = vpack.c.b16 %v315, %v314
    %v392 = vpack.c.b16 %v317, %v316
    %v393 = vpack.c.b16 %v319, %v318
    %v394 = vpack.c.b16 %v321, %v320
    %v395 = vpack.c.b16 %v323, %v322
    %v396 = vpack.c.b16 %v325, %v324
    %v397 = vpack.c.b16 %v327, %v326
    %v398 = vpack.c.b16 %v329, %v328
    %v399 = vpack.c.b16 %v331, %v330
    %v400 = vpack.c.b16 %v333, %v332
    %v401 = vpack.c.b16 %v335, %v334
    %v402 = vpack.c.b16 %v337, %v336
    %v403 = vpack.c.b16 %v339, %v338
    %v404 = vpack.c.b16 %v341, %v340
    %v405 = vpack.c.b16 %v343, %v342
    %v406 = vpack.c.b16 %v345, %v344
    %v407 = vpack.c.b16 %v347, %v346
    %v408 = vpack.c.b16 %v349, %v348
    %v409 = vpack.c.b16 %v351, %v350
    %v410 = vpack.c.b16 %v353, %v352
    %v411 = vpack.c.b16 %v355, %v354
    %v412 = vpack.c.b16 %v357, %v356
    %v413 = vpack.c.b16 %v359, %v358
    %v414 = vpack.c.b16 %v361, %v360
    %v415 = vpack.c.b16 %v363, %v362
    %v416 = vpack.c.b16 %v365, %v364
    %v417 = vpack.c.b16 %v367, %v366
    %v418 = vpack.c.b16 %v369, %v368
    %v419 = vpack.c.b16 %v371, %v370
    %v420 = vpack.c.b16 %v373, %v372
    %v421 = vpack.c.b16 %v375, %v374
    %v422 = vpack.c.b16 %v377, %v376
    %v423 = vpack.c.b16 %v379, %v378
    %v424 = vpack.c.b16 %v381, %v380
    %v425 = vpack.c.b16 %v383, %v382
    %v426 = vpack.c.b16 %v385, %v384
    %v427 = vpack.c.b16 %v387, %v386
    %468 = vmatpush.bf16.msra.mxu0 %v395
    %469 = vmatpush.bf16.msra.mxu0 %v394
    %470 = vmatpush.bf16.msra.mxu0 %v393
    %471 = vmatpush.bf16.msra.mxu0 %v392
    %472 = vmatpush.bf16.msra.mxu0 %v391
    %473 = vmatpush.bf16.msra.mxu0 %v390
    %474 = vmatpush.bf16.msra.mxu0 %v389
    %475 = vmatpush.bf16.msra.mxu0 %v388
    %476 = vmatmul.bf16.gmra.mxu0 %v218
    %v477 = vpop.f32.mrf.mxu0
    %v478 = vadd.f32 %v208, %v477
    %v479 = vpop.f32.mrf.mxu0
    %480 = vdwg.mxu0
    %481 = vmatpush.bf16.msra.mxu0 %v403
    %482 = vmatpush.bf16.msra.mxu0 %v402
    %483 = vmatpush.bf16.msra.mxu0 %v401
    %484 = vmatpush.bf16.msra.mxu0 %v400
    %485 = vmatpush.bf16.msra.mxu0 %v399
    %486 = vmatpush.bf16.msra.mxu0 %v398
    %487 = vmatpush.bf16.msra.mxu0 %v397
    %488 = vmatpush.bf16.msra.mxu0 %v396
    %489 = vmatmul.bf16.gmra.mxu0 %v219
    %v490 = vpop.f32.mrf.mxu0
    %v491 = vadd.f32 %v478, %v490
    %v492 = vpop.f32.mrf.mxu0
    %493 = vdwg.mxu0
    %494 = vmatpush.bf16.msra.mxu0 %v411
    %495 = vmatpush.bf16.msra.mxu0 %v410
    %496 = vmatpush.bf16.msra.mxu0 %v409
    %497 = vmatpush.bf16.msra.mxu0 %v408
    %498 = vmatpush.bf16.msra.mxu0 %v407
    %499 = vmatpush.bf16.msra.mxu0 %v406
    %500 = vmatpush.bf16.msra.mxu0 %v405
    %501 = vmatpush.bf16.msra.mxu0 %v404
    %502 = vmatmul.bf16.gmra.mxu0 %v220
    %v503 = vpop.f32.mrf.mxu0
    %v504 = vadd.f32 %v491, %v503
    %v505 = vpop.f32.mrf.mxu0
    %506 = vdwg.mxu0
    %507 = vmatpush.bf16.msra.mxu0 %v419
    %508 = vmatpush.bf16.msra.mxu0 %v418
    %509 = vmatpush.bf16.msra.mxu0 %v417
    %510 = vmatpush.bf16.msra.mxu0 %v416
    %511 = vmatpush.bf16.msra.mxu0 %v415
    %512 = vmatpush.bf16.msra.mxu0 %v414
    %513 = vmatpush.bf16.msra.mxu0 %v413
    %514 = vmatpush.bf16.msra.mxu0 %v412
    %515 = vmatmul.bf16.gmra.mxu0 %v221
    %v516 = vpop.f32.mrf.mxu0
    %v517 = vadd.f32 %v504, %v516
    %v518 = vpop.f32.mrf.mxu0
    %519 = vdwg.mxu0
    %520 = vmatpush.bf16.msra.mxu0 %v427
    %521 = vmatpush.bf16.msra.mxu0 %v426
    %522 = vmatpush.bf16.msra.mxu0 %v425
    %523 = vmatpush.bf16.msra.mxu0 %v424
    %524 = vmatpush.bf16.msra.mxu0 %v423
    %525 = vmatpush.bf16.msra.mxu0 %v422
    %526 = vmatpush.bf16.msra.mxu0 %v421
    %527 = vmatpush.bf16.msra.mxu0 %v420
    %528 = vmatmul.bf16.gmra.mxu0 %v222
    %v529 = vpop.f32.mrf.mxu0
    %v530 = vadd.f32 %v517, %v529
    %v531 = vpop.f32.mrf.mxu0
    %532 = vdwg.mxu0
    %v533 = vmax.f32 %v530, 0.0
    %v534 = vpack.c.bf16 %v533, %v533
    %v535 = vld [vmem:[#allocation8] sm:$0xf]
    %v536 = vld [vmem:[#allocation8 + $0x4] sm:$0xf]
    %v537 = vld [vmem:[#allocation8 + $0x8] sm:$0xf]
    %v538 = vld [vmem:[#allocation8 + $0xc] sm:$0xf]
    %v539 = vld [vmem:[#allocation8 + $0x10] sm:$0xf]
    %v540 = vld [vmem:[#allocation8 + $0x14] sm:$0xf]
    %v541 = vld [vmem:[#allocation8 + $0x18] sm:$0xf]
    %v542 = vld [vmem:[#allocation8 + $0x1c] sm:$0xf]
    %v543 = vld [vmem:[#allocation8 + $0x20] sm:$0xf]
    %v544 = vld [vmem:[#allocation8 + $0x24] sm:$0xf]
    %v545 = vld [vmem:[#allocation8 + $0x28] sm:$0xf]
    %v546 = vld [vmem:[#allocation8 + $0x2c] sm:$0xf]
    %v547 = vld [vmem:[#allocation8 + $0x30] sm:$0xf]
    %v548 = vld [vmem:[#allocation8 + $0x34] sm:$0xf]
    %v549 = vld [vmem:[#allocation8 + $0x38] sm:$0xf]
    %v550 = vld [vmem:[#allocation8 + $0x3c] sm:$0xf]
    %v551 = vld [vmem:[%s4] sm:$0x1]
    %v553 = vperm.slane %v551, 0
    %v571 = vunpack.c.l.b16 %v535
    %v572 = vunpack.c.l.b16 %v536
    %v573 = vunpack.c.l.b16 %v537
    %v574 = vunpack.c.l.b16 %v538
    %v575 = vunpack.c.l.b16 %v539
    %v576 = vunpack.c.l.b16 %v540
    %v577 = vunpack.c.l.b16 %v541
    %v578 = vunpack.c.l.b16 %v542
    %v579 = vunpack.c.l.b16 %v543
    %v580 = vunpack.c.l.b16 %v544
    %v581 = vunpack.c.l.b16 %v545
    %v582 = vunpack.c.l.b16 %v546
    %v583 = vunpack.c.l.b16 %v547
    %v584 = vunpack.c.l.b16 %v548
    %v585 = vunpack.c.l.b16 %v549
    %v586 = vunpack.c.l.b16 %v550
    %v587 = vpack.c.b16 %v572, %v571
    %v588 = vpack.c.b16 %v574, %v573
    %v589 = vpack.c.b16 %v576, %v575
    %v590 = vpack.c.b16 %v578, %v577
    %v591 = vpack.c.b16 %v580, %v579
    %v592 = vpack.c.b16 %v582, %v581
    %v593 = vpack.c.b16 %v584, %v583
    %v594 = vpack.c.b16 %v586, %v585
    %603 = vmatpush.bf16.msra.mxu0 %v594
    %604 = vmatpush.bf16.msra.mxu0 %v593
    %605 = vmatpush.bf16.msra.mxu0 %v592
    %606 = vmatpush.bf16.msra.mxu0 %v591
    %607 = vmatpush.bf16.msra.mxu0 %v590
    %608 = vmatpush.bf16.msra.mxu0 %v589
    %609 = vmatpush.bf16.msra.mxu0 %v588
    %610 = vmatpush.bf16.msra.mxu0 %v587
    %611 = vmatmul.bf16.gmra.mxu0 %v534
    %v612 = vpop.f32.mrf.mxu0
    %v613 = vadd.f32 %v553, %v612
    %v614 = vpop.f32.mrf.mxu0
    %615 = vdwg.mxu0
    %v616 = vmax.f32 %v613, 0.0
    %v617 = vpack.c.bf16 %v616, %v616
    %v618 = vld [vmem:[#allocation9] sm:$0xf]
    %v619 = vld [vmem:[#allocation9 + $0x4] sm:$0xf]
    %v620 = vld [vmem:[#allocation9 + $0x8] sm:$0xf]
    %v621 = vld [vmem:[#allocation9 + $0xc] sm:$0xf]
    %v622 = vld [vmem:[#allocation9 + $0x10] sm:$0xf]
    %v623 = vld [vmem:[#allocation9 + $0x14] sm:$0xf]
    %v624 = vld [vmem:[#allocation9 + $0x18] sm:$0xf]
    %v625 = vld [vmem:[#allocation9 + $0x1c] sm:$0xf]
    %v626 = vld [vmem:[#allocation9 + $0x20] sm:$0xf]
    %v627 = vld [vmem:[#allocation9 + $0x24] sm:$0xf]
    %v628 = vld [vmem:[#allocation9 + $0x28] sm:$0xf]
    %v629 = vld [vmem:[#allocation9 + $0x2c] sm:$0xf]
    %v630 = vld [vmem:[#allocation9 + $0x30] sm:$0xf]
    %v631 = vld [vmem:[#allocation9 + $0x34] sm:$0xf]
    %v632 = vld [vmem:[#allocation9 + $0x38] sm:$0xf]
    %v633 = vld [vmem:[#allocation9 + $0x3c] sm:$0xf]
    %v634 = vld [vmem:[%s6] sm:$0x1]
    %v636 = vperm.slane %v634, 0
    %v654 = vunpack.c.l.b16 %v618
    %v655 = vunpack.c.l.b16 %v619
    %v656 = vunpack.c.l.b16 %v620
    %v657 = vunpack.c.l.b16 %v621
    %v658 = vunpack.c.l.b16 %v622
    %v659 = vunpack.c.l.b16 %v623
    %v660 = vunpack.c.l.b16 %v624
    %v661 = vunpack.c.l.b16 %v625
    %v662 = vunpack.c.l.b16 %v626
    %v663 = vunpack.c.l.b16 %v627
    %v664 = vunpack.c.l.b16 %v628
    %v665 = vunpack.c.l.b16 %v629
    %v666 = vunpack.c.l.b16 %v630
    %v667 = vunpack.c.l.b16 %v631
    %v668 = vunpack.c.l.b16 %v632
    %v669 = vunpack.c.l.b16 %v633
    %v670 = vpack.c.b16 %v655, %v654
    %v671 = vpack.c.b16 %v657, %v656
    %v672 = vpack.c.b16 %v659, %v658
    %v673 = vpack.c.b16 %v661, %v660
    %v674 = vpack.c.b16 %v663, %v662
    %v675 = vpack.c.b16 %v665, %v664
    %v676 = vpack.c.b16 %v667, %v666
    %v677 = vpack.c.b16 %v669, %v668
    %686 = vmatpush.bf16.msra.mxu0 %v677
    %687 = vmatpush.bf16.msra.mxu0 %v676
    %688 = vmatpush.bf16.msra.mxu0 %v675
    %689 = vmatpush.bf16.msra.mxu0 %v674
    %690 = vmatpush.bf16.msra.mxu0 %v673
    %691 = vmatpush.bf16.msra.mxu0 %v672
    %692 = vmatpush.bf16.msra.mxu0 %v671
    %693 = vmatpush.bf16.msra.mxu0 %v670
    %694 = vmatmul.bf16.gmra.mxu0 %v617
    %v695 = vpop.f32.mrf.mxu0
    %v696 = vadd.f32 %v636, %v695
    %v697 = vpop.f32.mrf.mxu0
    %698 = vdwg.mxu0
    %v699 = vmax.f32 %v696, 0.0
    %v700 = vpack.c.bf16 %v699, %v699
    %v701 = vld [vmem:[#allocation11] sm:$0xf]
    %v702 = vld [vmem:[#allocation11 + $0x4] sm:$0xf]
    %v703 = vld [vmem:[#allocation11 + $0x8] sm:$0xf]
    %v704 = vld [vmem:[#allocation11 + $0xc] sm:$0xf]
    %v705 = vld [vmem:[#allocation11 + $0x10] sm:$0xf]
    %v706 = vld [vmem:[#allocation11 + $0x14] sm:$0xf]
    %v707 = vld [vmem:[#allocation11 + $0x18] sm:$0xf]
    %v708 = vld [vmem:[#allocation11 + $0x1c] sm:$0xf]
    %v709 = vld [vmem:[#allocation11 + $0x20] sm:$0xf]
    %v710 = vld [vmem:[#allocation11 + $0x24] sm:$0xf]
    %v711 = vld [vmem:[#allocation11 + $0x28] sm:$0xf]
    %v712 = vld [vmem:[#allocation11 + $0x2c] sm:$0xf]
    %v713 = vld [vmem:[#allocation11 + $0x30] sm:$0xf]
    %v714 = vld [vmem:[#allocation11 + $0x34] sm:$0xf]
    %v715 = vld [vmem:[#allocation11 + $0x38] sm:$0xf]
    %v716 = vld [vmem:[#allocation11 + $0x3c] sm:$0xf]
    %v717 = vld [vmem:[%s8] sm:$0x1]
    %v719 = vperm.slane %v717, 0
    %v737 = vunpack.c.l.b16 %v701
    %v738 = vunpack.c.l.b16 %v702
    %v739 = vunpack.c.l.b16 %v703
    %v740 = vunpack.c.l.b16 %v704
    %v741 = vunpack.c.l.b16 %v705
    %v742 = vunpack.c.l.b16 %v706
    %v743 = vunpack.c.l.b16 %v707
    %v744 = vunpack.c.l.b16 %v708
    %v745 = vunpack.c.l.b16 %v709
    %v746 = vunpack.c.l.b16 %v710
    %v747 = vunpack.c.l.b16 %v711
    %v748 = vunpack.c.l.b16 %v712
    %v749 = vunpack.c.l.b16 %v713
    %v750 = vunpack.c.l.b16 %v714
    %v751 = vunpack.c.l.b16 %v715
    %v752 = vunpack.c.l.b16 %v716
    %v753 = vpack.c.b16 %v738, %v737
    %v754 = vpack.c.b16 %v740, %v739
    %v755 = vpack.c.b16 %v742, %v741
    %v756 = vpack.c.b16 %v744, %v743
    %v757 = vpack.c.b16 %v746, %v745
    %v758 = vpack.c.b16 %v748, %v747
    %v759 = vpack.c.b16 %v750, %v749
    %v760 = vpack.c.b16 %v752, %v751
    %769 = vmatpush.bf16.msra.mxu0 %v760
    %770 = vmatpush.bf16.msra.mxu0 %v759
    %771 = vmatpush.bf16.msra.mxu0 %v758
    %772 = vmatpush.bf16.msra.mxu0 %v757
    %773 = vmatpush.bf16.msra.mxu0 %v756
    %774 = vmatpush.bf16.msra.mxu0 %v755
    %775 = vmatpush.bf16.msra.mxu0 %v754
    %776 = vmatpush.bf16.msra.mxu0 %v753
    %777 = vmatmul.bf16.gmra.mxu0 %v700
    %v778 = vpop.f32.mrf.mxu0
    %v779 = vadd.f32 %v719, %v778
    %v780 = vpop.f32.mrf.mxu0
    %781 = vdwg.mxu0
    %v782 = vpack.c.bf16 %v779, %v779
    %783 = vst [vmem:[#allocation12] sm:$0xf] %v782
    // Predicated region
    $region58: #{tpu_custom_call.1} parent=1 // pred_check
      _
    $region59: #{tpu_custom_call.1} parent=1 // pred_check_branch
      %785 = sbr.rel (0) target = $region61
    $region60: #{tpu_custom_call.1} parent=1 // pred_region
      %787 = vsyncadd [#allocation5], 0
      %s789 = sshll.u32 [#allocation12], 4
      %s790 = int_to_ptr.vmem [resolvable:$true] %s789
      %s791 = sshll.u32 %s9, 4
      %s792 = int_to_ptr.hbm [resolvable:$true] %s791
      %794 = dma.vmem_to_hbm [thread:$0]  %s790, 64, %s792, [#allocation5]
    $region61: #{tpu_custom_call.1} parent=1 // pred_fallthru
      _
    // Predicated region
    $region62: #{tpu_custom_call.1} parent=1 // pred_check
      _
    $region63: #{tpu_custom_call.1} parent=1 // pred_check_branch
      %796 = sbr.rel (0) target = $region65
    $region64: #{tpu_custom_call.1} parent=1 // pred_region
      %798 = dma.done [#allocation5], 64
    $region65: #{tpu_custom_call.1} parent=1 // pred_fallthru
      _
    %799 = vsyncpa [#allocation4], 1
    %800 = vsyncpa [#allocation7], 1
    %801 = vsyncpa [#allocation10], 1
    %802 = vsyncpa [#allocation5], 1

</llo_original>
